<compile_context>
chip_gen: v6e
topology: v6e:2x2x1
jax: 0.10.0
libtpu: 0.0.40
codegen_flags: <defaults>
</compile_context>

<pallas_src>
import jax
import jax.numpy as jnp
from jax.experimental import pallas as pl
from jax.experimental.pallas import tpu as pltpu


def _actor_kernel(x_ref, w_ref, b_ref, o_ref):
    """x: (TB, in) f32, w: (in, out) f32, b: (1, out) f32, o: (TB, out) f32."""
    z = jnp.dot(x_ref[...], w_ref[...], preferred_element_type=jnp.float32)
    z = z + b_ref[...]
    z = jnp.maximum(z, jnp.float32(0.0))          # ReLU

    # Numerically-stable softmax along the last dim (exact division so each
    # row sums to 1.0 to f32 rounding).
    m = jnp.max(z, axis=-1, keepdims=True)
    e = jnp.exp(z - m)
    denom = jnp.sum(e, axis=-1, keepdims=True)
    o_ref[...] = (e / denom).astype(o_ref.dtype)


def _round_up(x, m):
    return ((x + m - 1) // m) * m


def actor_forward(x, weight, bias, *, block_b=4096):
    """x: (B, in) f32; weight: (out, in) f32 (PyTorch nn.Linear layout); bias: (out,) f32."""
    B, in_size = x.shape
    out_size, in_size_w = weight.shape
    assert in_size_w == in_size

    # One-time, tiny: present the weight as (in, out) so the kernel matmul is
    # a plain NN dot with no per-step relayout of the resident weight tile.
    wt = weight.T
    b2 = bias.reshape(1, out_size)

    bytes_per_row = 4 * (in_size + out_size)   # streamed x row + out row

    if B <= block_b:
        # Small batch: no grid at all — everything VMEM-resident, single call,
        # compact (B, out_size) output, nothing padded or sliced.
        cost = pl.CostEstimate(
            flops=2 * B * in_size * out_size + 6 * B * out_size,
            transcendentals=B * out_size,
            bytes_accessed=4 * (B * in_size + in_size * out_size
                                + out_size + B * out_size),
        )
        return pl.pallas_call(
            _actor_kernel,
            out_shape=jax.ShapeDtypeStruct((B, out_size), jnp.float32),
            in_specs=[
                pl.BlockSpec(memory_space=pltpu.MemorySpace.VMEM),
                pl.BlockSpec(memory_space=pltpu.MemorySpace.VMEM),
                pl.BlockSpec(memory_space=pltpu.MemorySpace.VMEM),
            ],
            out_specs=pl.BlockSpec(memory_space=pltpu.MemorySpace.VMEM),
            cost_estimate=cost,
        )(x, wt, b2)

    # Large batch: tile over B.  Weight/bias stay VMEM-resident (constant
    # index_map); x / out stream from/to HBM.  No wrapper-side padding: the
    # last (possibly partial) block is handled by Pallas' OOB masking.
    # Keep the double-buffered streaming footprint comfortably inside v7x's
    # 64 MiB VMEM, and keep the grid >= 2 steps so the "parallel" axis can be
    # split across v7x's two TensorCores.
    vmem_stream_budget = 24 * 1024 * 1024
    tb_cap = max(8, (vmem_stream_budget // (2 * bytes_per_row)) // 8 * 8)
    tb = min(block_b, tb_cap, _round_up(pl.cdiv(B, 2), 8))
    tb = max(8, tb // 8 * 8)
    grid = pl.cdiv(B, tb)

    stream_bytes = 2 * tb * bytes_per_row                      # double-buffered x + out
    resident_bytes = 4 * (in_size * out_size + out_size)       # weight + bias
    vmem_limit = min(64 * 1024 * 1024,
                     max(16 * 1024 * 1024,
                         2 * stream_bytes + resident_bytes + (2 << 20)))

    rows = grid * tb
    cost = pl.CostEstimate(
        flops=2 * rows * in_size * out_size + 6 * rows * out_size,
        transcendentals=rows * out_size,
        bytes_accessed=4 * (rows * in_size + in_size * out_size
                            + out_size + rows * out_size),
    )
    return pl.pallas_call(
        _actor_kernel,
        out_shape=jax.ShapeDtypeStruct((B, out_size), jnp.float32),
        grid=(grid,),
        in_specs=[
            pl.BlockSpec((tb, in_size), lambda i: (i, 0)),
            pl.BlockSpec((in_size, out_size), lambda i: (0, 0)),  # resident
            pl.BlockSpec((1, out_size), lambda i: (0, 0)),        # resident
        ],
        out_specs=pl.BlockSpec((tb, out_size), lambda i: (i, 0)),
        compiler_params=pltpu.CompilerParams(
            dimension_semantics=("parallel",),
            vmem_limit_bytes=int(vmem_limit)),
        cost_estimate=cost,
    )(x, wt, b2)


def actor_reference(x, weight, bias):
    z = x @ weight.T + bias
    z = jnp.maximum(z, 0.0)
    return jax.nn.softmax(z, axis=-1)


if __name__ == "__main__":
    # Small shapes consistent with Actor(input_size, output_size).
    B, input_size, output_size = 8, 32, 16

    key = jax.random.PRNGKey(0)
    kx, kw, kb = jax.random.split(key, 3)

    # nn.Linear-style U(-1/sqrt(in), 1/sqrt(in)) init.
    bound = 1.0 / jnp.sqrt(jnp.float32(input_size))
    weight = jax.random.uniform(kw, (output_size, input_size), jnp.float32,
                                minval=-bound, maxval=bound)
    bias = jax.random.uniform(kb, (output_size,), jnp.float32,
                              minval=-bound, maxval=bound)
    x = jax.random.normal(kx, (B, input_size), jnp.float32)

    # Small-batch (no-grid) path.
    out = jax.block_until_ready(actor_forward(x, weight, bias))
    ref = actor_reference(x, weight, bias)
    assert out.shape == (B, output_size)
    assert jnp.allclose(out, ref, atol=1e-3, rtol=1e-3)
    assert jnp.allclose(jnp.sum(out, axis=-1), 1.0, atol=1e-4)

    # Exercise the B-tiled grid path (non-multiple batch -> masked tail block).
    B2 = 1040
    x2 = jax.random.normal(jax.random.PRNGKey(1), (B2, input_size), jnp.float32)
    out2 = jax.block_until_ready(actor_forward(x2, weight, bias, block_b=256))
    ref2 = actor_reference(x2, weight, bias)
    assert out2.shape == (B2, output_size)
    assert jnp.allclose(out2, ref2, atol=1e-3, rtol=1e-3)
    assert jnp.allclose(jnp.sum(out2, axis=-1), 1.0, atol=1e-4)

    print("KERNEL_OK")
</pallas_src>

<mosaic_0001>
module attributes {stable_mosaic.version = 11 : i64} {
  func.func @_actor_kernel(%arg0: memref<8x32xf32, #tpu.memory_space<vmem>>, %arg1: memref<32x16xf32, #tpu.memory_space<vmem>>, %arg2: memref<1x16xf32, #tpu.memory_space<vmem>>, %arg3: memref<8x16xf32, #tpu.memory_space<vmem>>) attributes {dimension_semantics = [], scalar_prefetch = 0 : i64, scratch_operands = 0 : i64, tpu.core_type = #tpu.core_type<tc>} {
    %c0 = arith.constant 0 : index
    %c0_0 = arith.constant 0 : index
    %0 = vector.load %arg0[%c0, %c0_0] : memref<8x32xf32, #tpu.memory_space<vmem>>, vector<8x32xf32>
    %c0_1 = arith.constant 0 : index
    %c0_2 = arith.constant 0 : index
    %1 = vector.load %arg1[%c0_1, %c0_2] : memref<32x16xf32, #tpu.memory_space<vmem>>, vector<32x16xf32>
    %cst = arith.constant dense<0.000000e+00> : vector<8x16xf32>
    %2 = tpu.matmul %0, %1, %cst {dimension_numbers = #tpu.dot_dimension_numbers<[1], [0], [0], [1], [0, 0, 1, 1], [], []>} : vector<8x32xf32>, vector<32x16xf32>, vector<8x16xf32> -> vector<8x16xf32>
    %c0_3 = arith.constant 0 : index
    %c0_4 = arith.constant 0 : index
    %3 = vector.load %arg2[%c0_3, %c0_4] : memref<1x16xf32, #tpu.memory_space<vmem>>, vector<1x16xf32>
    %4 = vector.broadcast %3 : vector<1x16xf32> to vector<8x16xf32>
    %5 = arith.addf %2, %4 : vector<8x16xf32>
    %cst_5 = arith.constant 0.000000e+00 : f32
    %6 = vector.broadcast %cst_5 : f32 to vector<8x16xf32>
    %7 = arith.maximumf %5, %6 : vector<8x16xf32>
    %cst_6 = arith.constant dense<0xFF800000> : vector<8xf32>
    %8 = vector.multi_reduction <maximumf>, %7, %cst_6 [1] : vector<8x16xf32> to vector<8xf32>
    %9 = vector.shape_cast %8 : vector<8xf32> to vector<8x1xf32>
    %10 = vector.broadcast %9 : vector<8x1xf32> to vector<8x16xf32>
    %11 = arith.subf %7, %10 : vector<8x16xf32>
    %12 = math.exp %11 : vector<8x16xf32>
    %cst_7 = arith.constant dense<0.000000e+00> : vector<8xf32>
    %13 = vector.multi_reduction <add>, %12, %cst_7 [1] : vector<8x16xf32> to vector<8xf32>
    %14 = vector.shape_cast %13 : vector<8xf32> to vector<8x1xf32>
    %15 = vector.broadcast %14 : vector<8x1xf32> to vector<8x16xf32>
    %16 = arith.divf %12, %15 : vector<8x16xf32>
    %c0_8 = arith.constant 0 : index
    %c0_9 = arith.constant 0 : index
    %17 = vector.load %arg3[%c0_8, %c0_9] : memref<8x16xf32, #tpu.memory_space<vmem>>, vector<8x16xf32>
    tpu.vector_store %arg3[%c0_8, %c0_9], %16 {strides = array<i32>} : memref<8x16xf32, #tpu.memory_space<vmem>>, vector<8x16xf32>,
    return
  }
}

</mosaic_0001>

<llo_original>
// kernel: tpu_custom_call.1
$region0: #{tpu_custom_call.1}
  #allocation0 [shape = 'u32[]', space=smem, size = 0x4, offset = 0x4, fixed_abs, tag = 'smem constant byte address 0x4 - core index']
  #allocation1 [shape = 'u32[144,128]{1,0:T(1,128)}', space=vmem, size = 0x12000, scoped, tag = 'internal scratch']
  %s0 = inlined_call_operand.vmem [shape: f32[8,32], index: 0, kind: input, shape index: {}]
  %s1 = inlined_call_operand.vmem [shape: f32[32,16], index: 1, kind: input, shape index: {}]
  %s2 = inlined_call_operand.vmem [shape: f32[1,16], index: 2, kind: input, shape index: {}]
  %s3 = inlined_call_operand.hbm [shape: f32[8,16], index: 3, kind: output, shape index: {}]
  %s4 = sld [smem:[#allocation0]]
  $region22: #{tpu_custom_call.1} parent=0
    _
  %s6 = ssub.s32 1, %s4
  %s7 = scalar_select 0, %s6, %s4
  $region1: #{tpu_custom_call.1} parent=0
    #allocation2 [shape = 'u8[4096]{0}', space=vmem, size = 0x1000, scoped, tag = 'output window, operand 0, single buffered']
    #allocation3 [shape = 's32[1]{0}', space=sflag, size = 0x4, scoped, tag = 'scoped memory for tpu_custom_call.1']
    %8 = vsyncpa [#allocation3], 0
    // Predicated region
    $region2: #{tpu_custom_call.1} parent=1 // pred_check
      _
    $region3: #{tpu_custom_call.1} parent=1 // pred_check_branch
      %10 = sbr.rel (0) target = $region5
    $region4: #{tpu_custom_call.1} parent=1 // pred_region
      _
    $region5: #{tpu_custom_call.1} parent=1 // pred_fallthru
      _
    // Predicated region
    $region6: #{tpu_custom_call.1} parent=1 // pred_check
      _
    $region7: #{tpu_custom_call.1} parent=1 // pred_check_branch
      %12 = sbr.rel (0) target = $region9
    $region8: #{tpu_custom_call.1} parent=1 // pred_region
      _
    $region9: #{tpu_custom_call.1} parent=1 // pred_fallthru
      _
    // Predicated region
    $region10: #{tpu_custom_call.1} parent=1 // pred_check
      _
    $region11: #{tpu_custom_call.1} parent=1 // pred_check_branch
      %14 = sbr.rel (0) target = $region13
    $region12: #{tpu_custom_call.1} parent=1 // pred_region
      _
    $region13: #{tpu_custom_call.1} parent=1 // pred_fallthru
      _
    %v15 = vld [vmem:[%s0] sm:$0xff]
    %v16 = vld [vmem:[%s1] sm:$0xff]
    %v17 = vld [vmem:[%s1 + $0x8] sm:$0xff]
    %v18 = vld [vmem:[%s1 + $0x10] sm:$0xff]
    %v19 = vld [vmem:[%s1 + $0x18] sm:$0xff]
    %v20 = vld [vmem:[%s2] sm:$0x1]
    %v22 = vlaneseq
    %v23 = vshrl.u32 %v22, 7
    %v24 = vsub.s32 0, %v23
    %v25 = vrot.slane %v20, %v24
    %vm27 = vcmask 261120
    %v29 = vsel %vm27, %v15, 0
    %31 = vmatprep.subr.mxu0 0.0
    %32 = vmatpush1.msra.mxu0 0.0
    %33 = vmatprep.subr.mxu0 0.0
    %34 = vmatpush1.msra.mxu0 0.0
    %35 = vmatprep.subr.mxu0 0.0
    %36 = vmatpush1.msra.mxu0 0.0
    %37 = vmatprep.subr.mxu0 0.0
    %38 = vmatpush1.msra.mxu0 0.0
    %39 = vmatprep.subr.mxu0 0.0
    %40 = vmatpush1.msra.mxu0 0.0
    %41 = vmatprep.subr.mxu0 0.0
    %42 = vmatpush1.msra.mxu0 0.0
    %43 = vmatprep.subr.mxu0 0.0
    %44 = vmatpush1.msra.mxu0 0.0
    %45 = vmatprep.subr.mxu0 0.0
    %46 = vmatpush1.msra.mxu0 0.0
    %47 = vmatprep.subr.mxu0 0.0
    %48 = vmatpush1.msra.mxu0 0.0
    %49 = vmatprep.subr.mxu0 0.0
    %50 = vmatpush1.msra.mxu0 0.0
    %51 = vmatprep.subr.mxu0 0.0
    %52 = vmatpush1.msra.mxu0 0.0
    %53 = vmatprep.subr.mxu0 0.0
    %54 = vmatpush1.msra.mxu0 0.0
    %55 = vmatprep.subr.mxu0 0.0
    %56 = vmatpush1.msra.mxu0 %v19
    %57 = vmatprep.subr.mxu0 0.0
    %58 = vmatpush1.msra.mxu0 %v18
    %59 = vmatprep.subr.mxu0 0.0
    %60 = vmatpush1.msra.mxu0 %v17
    %61 = vmatprep.subr.mxu0 0.0
    %62 = vmatpush1.msra.mxu0 %v16
    %63 = vmatprep.subr.mxu0 0.0
    %64 = vmatpush2.msra.mxu0 0.0
    %65 = vmatprep.subr.mxu0 0.0
    %66 = vmatpush2.msra.mxu0 0.0
    %67 = vmatprep.subr.mxu0 0.0
    %68 = vmatpush2.msra.mxu0 0.0
    %69 = vmatprep.subr.mxu0 0.0
    %70 = vmatpush2.msra.mxu0 0.0
    %71 = vmatprep.subr.mxu0 0.0
    %72 = vmatpush2.msra.mxu0 0.0
    %73 = vmatprep.subr.mxu0 0.0
    %74 = vmatpush2.msra.mxu0 0.0
    %75 = vmatprep.subr.mxu0 0.0
    %76 = vmatpush2.msra.mxu0 0.0
    %77 = vmatprep.subr.mxu0 0.0
    %78 = vmatpush2.msra.mxu0 0.0
    %79 = vmatprep.subr.mxu0 0.0
    %80 = vmatpush2.msra.mxu0 0.0
    %81 = vmatprep.subr.mxu0 0.0
    %82 = vmatpush2.msra.mxu0 0.0
    %83 = vmatprep.subr.mxu0 0.0
    %84 = vmatpush2.msra.mxu0 0.0
    %85 = vmatprep.subr.mxu0 0.0
    %86 = vmatpush2.msra.mxu0 0.0
    %87 = vmatprep.subr.mxu0 0.0
    %88 = vmatpush2.msra.mxu0 0.0
    %89 = vmatprep.subr.mxu0 0.0
    %90 = vmatpush2.msra.mxu0 0.0
    %91 = vmatprep.subr.mxu0 0.0
    %92 = vmatpush2.msra.mxu0 0.0
    %93 = vmatprep.subr.mxu0 0.0
    %94 = vmatpush2.msra.mxu0 0.0
    %95 = vmatprep.mubr.f32.mxu0 0.0
    %96 = vmatmul.mubr.f32.gmra.mxu0 %v29
    %v97 = vpop.f32.mrf.mxu0
    %v98 = vadd.f32 %v25, %v97
    %v99 = vpop.f32.mrf.mxu0
    %100 = vdwg.mxu0
    %v101 = vmax.f32 %v98, 0.0
    %vm102 = vcmask 130048
    %v103 = vsel %vm102, %v101, -inf
    %104 = vmax.xlane.f32.xlu0 %v103
    %v105 = vpop.xlane.xlu0 %104
    %v106 = vsub.f32 %v101, %v105
    %v107 = vmul.f32 %v106, 1.442695
    %v108 = vpow.pop %v107
    %v109 = vsel %vm102, %v108, 0.0
    %110 = vadd.xlane.f32.xlu0 %v109
    %v111 = vpop.xlane.xlu0 %110
    %v112 = vrcp.pop %v111
    %v113 = vmul.f32 %v108, %v112
    %114 = vst.msk [vmem:[#allocation2] sm:$0xff] %vm102, %v113
    // Predicated region
    $region14: #{tpu_custom_call.1} parent=1 // pred_check
      _
    $region15: #{tpu_custom_call.1} parent=1 // pred_check_branch
      %116 = sbr.rel (0) target = $region17
    $region16: #{tpu_custom_call.1} parent=1 // pred_region
      %s118 = ssub.s32 128, 128
      %119 = vsyncadd [#allocation3], %s118
      %s121 = sshll.u32 [#allocation2], 4
      %s122 = int_to_ptr.vmem [resolvable:$true] %s121
      %124 = dma.vmem_to_hbm [thread:$0]  %s122, 128, %s3, [#allocation3]
    $region17: #{tpu_custom_call.1} parent=1 // pred_fallthru
      _
    // Predicated region
    $region18: #{tpu_custom_call.1} parent=1 // pred_check
      _
    $region19: #{tpu_custom_call.1} parent=1 // pred_check_branch
      %126 = sbr.rel (0) target = $region21
    $region20: #{tpu_custom_call.1} parent=1 // pred_region
      %127 = dma.done [#allocation3], 128
    $region21: #{tpu_custom_call.1} parent=1 // pred_fallthru
      _
    %128 = vsyncpa [#allocation3], 1

</llo_original>
